<compile_context>
chip_gen: v7x
topology: tpu7x:2x2x1
jax: 0.10.0
libtpu: 0.0.40
codegen_flags: <defaults>
</compile_context>

<pallas_src>
import functools

import jax
import jax.numpy as jnp
from jax.experimental import pallas as pl
from jax.experimental.pallas import tpu as pltpu


def _round_up(n, m):
    return (n + m - 1) // m * m


def _leaky_relu(x, slope):
    return jnp.where(x >= 0, x, slope * x)


def edge_mlp_kernel(x_ref,
                    w1_ref, b1_ref,
                    w2_ref, b2_ref,
                    w3_ref, b3_ref,
                    w4_ref, b4_ref,
                    o_ref,
                    *, approx_sigmoid):
    cdt = w1_ref.dtype  # matmul input dtype (f32 or bf16); accumulation is f32

    x = x_ref[...].astype(cdt)

    # l1 + leaky_relu (PyTorch default negative_slope = 0.01)
    h = jnp.dot(x, w1_ref[...], preferred_element_type=jnp.float32) + b1_ref[...]
    h = _leaky_relu(h, 0.01)
    # dropout -> identity (eval mode)

    # l2 + leaky_relu(0.02)
    h = jnp.dot(h.astype(cdt), w2_ref[...],
                preferred_element_type=jnp.float32) + b2_ref[...]
    h = _leaky_relu(h, 0.02)

    # l3 + leaky_relu(0.02)
    h = jnp.dot(h.astype(cdt), w3_ref[...],
                preferred_element_type=jnp.float32) + b3_ref[...]
    h = _leaky_relu(h, 0.02)

    # l4 + sigmoid
    h = jnp.dot(h.astype(cdt), w4_ref[...],
                preferred_element_type=jnp.float32) + b4_ref[...]
    if approx_sigmoid:
        # exp on the EUP + hardware reciprocal keeps the divide off the VALU.
        o = pl.reciprocal(1.0 + jnp.exp(-h), approx=True)
    else:
        o = jax.nn.sigmoid(h)
    o_ref[...] = o.astype(o_ref.dtype)


def edge_mlp_forward(x, params, *, block_b=4096, approx_sigmoid=False):
    """EdgeMLP forward (eval mode: dropout == identity).

    x:      [B, input_dim], streamed from HBM in its storage dtype.
    params: w{i} transposed to [in, out] (f32 or bf16), b{i}: [1, out] (f32).
    """
    B, in_dim = x.shape
    out_dim = params["w4"].shape[1]

    w1, b1 = params["w1"], params["b1"]
    w2, b2 = params["w2"], params["b2"]
    w3, b3 = params["w3"], params["b3"]
    w4, b4 = params["w4"], params["b4"]

    # Batch tile: multiple of 16 sublanes (valid tiling for f32 and bf16),
    # sized to amortize the per-grid-step overhead while staying tiny in VMEM.
    block_b = max(16, _round_up(block_b, 16))
    B16 = _round_up(B, 16)
    tb = min(block_b, B16)
    # For larger batches keep >=2 grid steps: v7x shards the "parallel" batch
    # axis across its 2 TensorCores, and >=2 steps is what lets the x/out
    # streams actually double-buffer.  (Harmless on single-TC v5e/v6e.)
    if B16 >= 512:
        tb = min(tb, _round_up(pl.cdiv(B16, 2), 16))
    grid = (pl.cdiv(B, tb),)

    args = (x, w1, b1, w2, b2, w3, b3, w4, b4)

    def resident_spec(a):
        # Whole array as one block; constant index_map -> DMA'd once and
        # VMEM-resident across all grid steps.
        return pl.BlockSpec(a.shape, lambda i, _n=a.ndim: (0,) * _n)

    in_specs = [pl.BlockSpec((tb, in_dim), lambda i: (i, 0))]
    in_specs += [resident_spec(a) for a in args[1:]]

    flops = 2 * B * sum(int(w.shape[0]) * int(w.shape[1])
                        for w in (w1, w2, w3, w4))
    bytes_accessed = (sum(int(a.size) * a.dtype.itemsize for a in args)
                      + B * out_dim * 4)

    kernel = functools.partial(edge_mlp_kernel, approx_sigmoid=approx_sigmoid)

    return pl.pallas_call(
        kernel,
        out_shape=jax.ShapeDtypeStruct((B, out_dim), jnp.float32),
        grid=grid,
        in_specs=in_specs,
        out_specs=pl.BlockSpec((tb, out_dim), lambda i: (i, 0)),
        compiler_params=pltpu.CompilerParams(
            dimension_semantics=("parallel",),
            vmem_limit_bytes=32 * 1024 * 1024),
        cost_estimate=pl.CostEstimate(
            flops=flops,
            transcendentals=B * out_dim,
            bytes_accessed=bytes_accessed),
    )(*args)


def cast_params_for_matmul(params, dtype=jnp.bfloat16):
    """One-time cast, outside the hot path: weights -> `dtype`, biases -> f32."""
    return {k: v.astype(dtype if k.startswith("w") else jnp.float32)
            for k, v in params.items()}


def init_params(key, m, input_dim, hidden_dim):
    """Weights stored transposed to [in, out]; biases as [1, out].
       Weights: xavier_uniform; biases: U(-1/sqrt(fan_in), 1/sqrt(fan_in))."""
    dims = [(input_dim, hidden_dim),
            (hidden_dim, hidden_dim // 2),
            (hidden_dim // 2, hidden_dim),
            (hidden_dim, 2 * m + 3)]
    params = {}
    for i, (fan_in, fan_out) in enumerate(dims, start=1):
        key, kw, kb = jax.random.split(key, 3)
        limit_w = jnp.sqrt(6.0 / (fan_in + fan_out))
        w = jax.random.uniform(kw, (fan_in, fan_out), jnp.float32,
                               -limit_w, limit_w)
        limit_b = 1.0 / jnp.sqrt(fan_in)
        b = jax.random.uniform(kb, (1, fan_out), jnp.float32,
                               -limit_b, limit_b)
        params[f"w{i}"] = w
        params[f"b{i}"] = b
    return params


def reference_forward(x, params):
    h = x @ params["w1"] + params["b1"]
    h = jnp.where(h >= 0, h, 0.01 * h)
    h = h @ params["w2"] + params["b2"]
    h = jnp.where(h >= 0, h, 0.02 * h)
    h = h @ params["w3"] + params["b3"]
    h = jnp.where(h >= 0, h, 0.02 * h)
    h = h @ params["w4"] + params["b4"]
    return jax.nn.sigmoid(h)


if __name__ == "__main__":
    # Small shapes consistent with the module.
    m = 4
    input_dim = 16
    hidden_dim = 32
    batch = 8

    key = jax.random.PRNGKey(0)
    key, kx = jax.random.split(key)
    x = jax.random.normal(kx, (batch, input_dim), jnp.float32)
    params = init_params(key, m, input_dim, hidden_dim)
    ref = reference_forward(x, params)

    # 1) f32 path, single tile (tight tolerance).
    out = jax.block_until_ready(edge_mlp_forward(x, params))
    assert out.shape == (batch, 2 * m + 3)
    assert jnp.allclose(out, ref, atol=1e-5, rtol=1e-5)

    # 2) Multi-step grid with a partial (masked) boundary tile: B=200, tb=64,
    #    grid=4, last tile has only 8 valid rows.  No wrapper pad/slice.
    key, kx2 = jax.random.split(key)
    x2 = jax.random.normal(kx2, (200, input_dim), jnp.float32)
    out2 = jax.block_until_ready(edge_mlp_forward(x2, params, block_b=64))
    ref2 = reference_forward(x2, params)
    assert out2.shape == (200, 2 * m + 3)
    assert jnp.allclose(out2, ref2, atol=1e-5, rtol=1e-5)

    # 3) bf16 matmul-input path (weights cast once outside the hot path, x
    #    stored bf16), f32 accumulation + f32 epilogue, EUP sigmoid.
    params_bf16 = cast_params_for_matmul(params)
    x_bf16 = x.astype(jnp.bfloat16)
    out3 = jax.block_until_ready(
        edge_mlp_forward(x_bf16, params_bf16, approx_sigmoid=True))
    assert out3.shape == (batch, 2 * m + 3)
    assert jnp.allclose(out3, ref, atol=3e-2, rtol=3e-2)

    print("KERNEL_OK")
</pallas_src>

<mosaic_0001>
module attributes {stable_mosaic.version = 11 : i64} {
  func.func @edge_mlp_kernel(%arg0: i32, %arg1: memref<16x16xf32, #tpu.memory_space<vmem>>, %arg2: memref<16x32xf32, #tpu.memory_space<vmem>>, %arg3: memref<1x32xf32, #tpu.memory_space<vmem>>, %arg4: memref<32x16xf32, #tpu.memory_space<vmem>>, %arg5: memref<1x16xf32, #tpu.memory_space<vmem>>, %arg6: memref<16x32xf32, #tpu.memory_space<vmem>>, %arg7: memref<1x32xf32, #tpu.memory_space<vmem>>, %arg8: memref<32x11xf32, #tpu.memory_space<vmem>>, %arg9: memref<1x11xf32, #tpu.memory_space<vmem>>, %arg10: memref<16x11xf32, #tpu.memory_space<vmem>>) attributes {dimension_semantics = [#tpu.dimension_semantics<parallel>], iteration_bounds = array<i64: 1>, scalar_prefetch = 0 : i64, scratch_operands = 0 : i64, tpu.core_type = #tpu.core_type<tc>, window_params = [{transform_indices = @transform_0, window_bounds = array<i64: 16, 16>}, {pipeline_mode = #tpu.pipeline_mode<synchronous>, transform_indices = @transform_1, window_bounds = array<i64: 16, 32>}, {pipeline_mode = #tpu.pipeline_mode<synchronous>, transform_indices = @transform_2, window_bounds = array<i64: 1, 32>}, {pipeline_mode = #tpu.pipeline_mode<synchronous>, transform_indices = @transform_3, window_bounds = array<i64: 32, 16>}, {pipeline_mode = #tpu.pipeline_mode<synchronous>, transform_indices = @transform_4, window_bounds = array<i64: 1, 16>}, {pipeline_mode = #tpu.pipeline_mode<synchronous>, transform_indices = @transform_5, window_bounds = array<i64: 16, 32>}, {pipeline_mode = #tpu.pipeline_mode<synchronous>, transform_indices = @transform_6, window_bounds = array<i64: 1, 32>}, {pipeline_mode = #tpu.pipeline_mode<synchronous>, transform_indices = @transform_7, window_bounds = array<i64: 32, 11>}, {pipeline_mode = #tpu.pipeline_mode<synchronous>, transform_indices = @transform_8, window_bounds = array<i64: 1, 11>}, {transform_indices = @transform_9, window_bounds = array<i64: 16, 11>}]} {
    %c0 = arith.constant 0 : index
    %c0_0 = arith.constant 0 : index
    %0 = vector.load %arg1[%c0, %c0_0] : memref<16x16xf32, #tpu.memory_space<vmem>>, vector<16x16xf32>
    %c0_1 = arith.constant 0 : index
    %c0_2 = arith.constant 0 : index
    %1 = vector.load %arg2[%c0_1, %c0_2] : memref<16x32xf32, #tpu.memory_space<vmem>>, vector<16x32xf32>
    %cst = arith.constant dense<0.000000e+00> : vector<16x32xf32>
    %2 = tpu.matmul %0, %1, %cst {dimension_numbers = #tpu.dot_dimension_numbers<[1], [0], [0], [1], [0, 0, 1, 1], [], []>} : vector<16x16xf32>, vector<16x32xf32>, vector<16x32xf32> -> vector<16x32xf32>
    %c0_3 = arith.constant 0 : index
    %c0_4 = arith.constant 0 : index
    %3 = vector.load %arg3[%c0_3, %c0_4] : memref<1x32xf32, #tpu.memory_space<vmem>>, vector<1x32xf32>
    %4 = vector.broadcast %3 : vector<1x32xf32> to vector<16x32xf32>
    %5 = arith.addf %2, %4 : vector<16x32xf32>
    %cst_5 = arith.constant 0.000000e+00 : f32
    %6 = vector.broadcast %cst_5 : f32 to vector<16x32xf32>
    %7 = arith.cmpf oge, %5, %6 : vector<16x32xf32>
    %cst_6 = arith.constant 0.00999999977 : f32
    %8 = vector.broadcast %cst_6 : f32 to vector<16x32xf32>
    %9 = arith.mulf %8, %5 : vector<16x32xf32>
    %10 = arith.select %7, %5, %9 : vector<16x32xi1>, vector<16x32xf32>
    %c0_7 = arith.constant 0 : index
    %c0_8 = arith.constant 0 : index
    %11 = vector.load %arg4[%c0_7, %c0_8] : memref<32x16xf32, #tpu.memory_space<vmem>>, vector<32x16xf32>
    %cst_9 = arith.constant dense<0.000000e+00> : vector<16x16xf32>
    %12 = tpu.matmul %10, %11, %cst_9 {dimension_numbers = #tpu.dot_dimension_numbers<[1], [0], [0], [1], [0, 0, 1, 1], [], []>} : vector<16x32xf32>, vector<32x16xf32>, vector<16x16xf32> -> vector<16x16xf32>
    %c0_10 = arith.constant 0 : index
    %c0_11 = arith.constant 0 : index
    %13 = vector.load %arg5[%c0_10, %c0_11] : memref<1x16xf32, #tpu.memory_space<vmem>>, vector<1x16xf32>
    %14 = vector.broadcast %13 : vector<1x16xf32> to vector<16x16xf32>
    %15 = arith.addf %12, %14 : vector<16x16xf32>
    %cst_12 = arith.constant 0.000000e+00 : f32
    %16 = vector.broadcast %cst_12 : f32 to vector<16x16xf32>
    %17 = arith.cmpf oge, %15, %16 : vector<16x16xf32>
    %cst_13 = arith.constant 2.000000e-02 : f32
    %18 = vector.broadcast %cst_13 : f32 to vector<16x16xf32>
    %19 = arith.mulf %18, %15 : vector<16x16xf32>
    %20 = arith.select %17, %15, %19 : vector<16x16xi1>, vector<16x16xf32>
    %c0_14 = arith.constant 0 : index
    %c0_15 = arith.constant 0 : index
    %21 = vector.load %arg6[%c0_14, %c0_15] : memref<16x32xf32, #tpu.memory_space<vmem>>, vector<16x32xf32>
    %cst_16 = arith.constant dense<0.000000e+00> : vector<16x32xf32>
    %22 = tpu.matmul %20, %21, %cst_16 {dimension_numbers = #tpu.dot_dimension_numbers<[1], [0], [0], [1], [0, 0, 1, 1], [], []>} : vector<16x16xf32>, vector<16x32xf32>, vector<16x32xf32> -> vector<16x32xf32>
    %c0_17 = arith.constant 0 : index
    %c0_18 = arith.constant 0 : index
    %23 = vector.load %arg7[%c0_17, %c0_18] : memref<1x32xf32, #tpu.memory_space<vmem>>, vector<1x32xf32>
    %24 = vector.broadcast %23 : vector<1x32xf32> to vector<16x32xf32>
    %25 = arith.addf %22, %24 : vector<16x32xf32>
    %cst_19 = arith.constant 0.000000e+00 : f32
    %26 = vector.broadcast %cst_19 : f32 to vector<16x32xf32>
    %27 = arith.cmpf oge, %25, %26 : vector<16x32xf32>
    %cst_20 = arith.constant 2.000000e-02 : f32
    %28 = vector.broadcast %cst_20 : f32 to vector<16x32xf32>
    %29 = arith.mulf %28, %25 : vector<16x32xf32>
    %30 = arith.select %27, %25, %29 : vector<16x32xi1>, vector<16x32xf32>
    %c0_21 = arith.constant 0 : index
    %c0_22 = arith.constant 0 : index
    %31 = vector.load %arg8[%c0_21, %c0_22] : memref<32x11xf32, #tpu.memory_space<vmem>>, vector<32x11xf32>
    %cst_23 = arith.constant dense<0.000000e+00> : vector<16x11xf32>
    %32 = tpu.matmul %30, %31, %cst_23 {dimension_numbers = #tpu.dot_dimension_numbers<[1], [0], [0], [1], [0, 0, 1, 1], [], []>} : vector<16x32xf32>, vector<32x11xf32>, vector<16x11xf32> -> vector<16x11xf32>
    %c0_24 = arith.constant 0 : index
    %c0_25 = arith.constant 0 : index
    %33 = vector.load %arg9[%c0_24, %c0_25] : memref<1x11xf32, #tpu.memory_space<vmem>>, vector<1x11xf32>
    %34 = vector.broadcast %33 : vector<1x11xf32> to vector<16x11xf32>
    %35 = arith.addf %32, %34 : vector<16x11xf32>
    %36 = arith.negf %35 : vector<16x11xf32>
    %37 = math.exp %36 : vector<16x11xf32>
    %cst_26 = arith.constant 1.000000e+00 : f32
    %38 = vector.broadcast %cst_26 : f32 to vector<16x11xf32>
    %39 = arith.addf %38, %37 : vector<16x11xf32>
    %40 = arith.divf %38, %39 : vector<16x11xf32>
    %c0_27 = arith.constant 0 : index
    %c0_28 = arith.constant 0 : index
    %41 = vector.load %arg10[%c0_27, %c0_28] : memref<16x11xf32, #tpu.memory_space<vmem>>, vector<16x11xf32>
    tpu.vector_store %arg10[%c0_27, %c0_28], %40 {strides = array<i32>} : memref<16x11xf32, #tpu.memory_space<vmem>>, vector<16x11xf32>,
    return
  }
  func.func @transform_0(%arg0: i32) -> (i32, i32) {
    %c0_i32 = arith.constant 0 : i32
    %c0_i32_0 = arith.constant 0 : i32
    return %arg0, %c0_i32 : i32, i32
  }
  func.func @transform_1(%arg0: i32) -> (i32, i32) {
    %c0_i32 = arith.constant 0 : i32
    %c0_i32_0 = arith.constant 0 : i32
    %c0_i32_1 = arith.constant 0 : i32
    return %c0_i32, %c0_i32_0 : i32, i32
  }
  func.func @transform_2(%arg0: i32) -> (i32, i32) {
    %c0_i32 = arith.constant 0 : i32
    %c0_i32_0 = arith.constant 0 : i32
    %c0_i32_1 = arith.constant 0 : i32
    return %c0_i32, %c0_i32_0 : i32, i32
  }
  func.func @transform_3(%arg0: i32) -> (i32, i32) {
    %c0_i32 = arith.constant 0 : i32
    %c0_i32_0 = arith.constant 0 : i32
    %c0_i32_1 = arith.constant 0 : i32
    return %c0_i32, %c0_i32_0 : i32, i32
  }
  func.func @transform_4(%arg0: i32) -> (i32, i32) {
    %c0_i32 = arith.constant 0 : i32
    %c0_i32_0 = arith.constant 0 : i32
    %c0_i32_1 = arith.constant 0 : i32
    return %c0_i32, %c0_i32_0 : i32, i32
  }
  func.func @transform_5(%arg0: i32) -> (i32, i32) {
    %c0_i32 = arith.constant 0 : i32
    %c0_i32_0 = arith.constant 0 : i32
    %c0_i32_1 = arith.constant 0 : i32
    return %c0_i32, %c0_i32_0 : i32, i32
  }
  func.func @transform_6(%arg0: i32) -> (i32, i32) {
    %c0_i32 = arith.constant 0 : i32
    %c0_i32_0 = arith.constant 0 : i32
    %c0_i32_1 = arith.constant 0 : i32
    return %c0_i32, %c0_i32_0 : i32, i32
  }
  func.func @transform_7(%arg0: i32) -> (i32, i32) {
    %c0_i32 = arith.constant 0 : i32
    %c0_i32_0 = arith.constant 0 : i32
    %c0_i32_1 = arith.constant 0 : i32
    return %c0_i32, %c0_i32_0 : i32, i32
  }
  func.func @transform_8(%arg0: i32) -> (i32, i32) {
    %c0_i32 = arith.constant 0 : i32
    %c0_i32_0 = arith.constant 0 : i32
    %c0_i32_1 = arith.constant 0 : i32
    return %c0_i32, %c0_i32_0 : i32, i32
  }
  func.func @transform_9(%arg0: i32) -> (i32, i32) {
    %c0_i32 = arith.constant 0 : i32
    %c0_i32_0 = arith.constant 0 : i32
    return %arg0, %c0_i32 : i32, i32
  }
}

</mosaic_0001>

<llo_original>
// kernel: tpu_custom_call.1
$region0: #{tpu_custom_call.1}
  #allocation0 [shape = 'u32[]', space=smem, size = 0x4, offset = 0x4, fixed_abs, tag = 'smem constant byte address 0x4 - core index']
  #allocation1 [shape = 'u32[144,128]{1,0:T(1,128)}', space=vmem, size = 0x12000, scoped, tag = 'internal scratch']
  %s0 = inlined_call_operand.vmem [shape: f32[8,16], index: 0, kind: input, shape index: {}]
  %s1 = inlined_call_operand.vmem [shape: f32[16,32], index: 1, kind: input, shape index: {}]
  %s2 = inlined_call_operand.vmem [shape: f32[1,32], index: 2, kind: input, shape index: {}]
  %s3 = inlined_call_operand.vmem [shape: f32[32,16], index: 3, kind: input, shape index: {}]
  %s4 = inlined_call_operand.vmem [shape: f32[1,16], index: 4, kind: input, shape index: {}]
  %s5 = inlined_call_operand.vmem [shape: f32[16,32], index: 5, kind: input, shape index: {}]
  %s6 = inlined_call_operand.vmem [shape: f32[1,32], index: 6, kind: input, shape index: {}]
  %s7 = inlined_call_operand.vmem [shape: f32[32,11], index: 7, kind: input, shape index: {}]
  %s8 = inlined_call_operand.vmem [shape: f32[1,11], index: 8, kind: input, shape index: {}]
  %s9 = inlined_call_operand.hbm [shape: f32[8,11], index: 9, kind: output, shape index: {}]
  %s10 = sld [smem:[#allocation0]]
  $region46: #{tpu_custom_call.1} parent=0
    _
  %s12 = ssub.s32 1, %s10
  %s13 = scalar_select 0, %s12, %s10
  $region1: #{tpu_custom_call.1} parent=0
    #allocation2 [shape = 'u8[8192]{0}', space=vmem, size = 0x2000, scoped, tag = 'output window, operand 0, single buffered']
    #allocation3 [shape = 's32[1]{0}', space=sflag, size = 0x4, scoped, tag = 'scoped memory for tpu_custom_call.1']
    %14 = vsyncpa [#allocation3], 0
    // Predicated region
    $region2: #{tpu_custom_call.1} parent=1 // pred_check
      _
    $region3: #{tpu_custom_call.1} parent=1 // pred_check_branch
      %16 = sbr.rel (0) target = $region5
    $region4: #{tpu_custom_call.1} parent=1 // pred_region
      _
    $region5: #{tpu_custom_call.1} parent=1 // pred_fallthru
      _
    // Predicated region
    $region6: #{tpu_custom_call.1} parent=1 // pred_check
      _
    $region7: #{tpu_custom_call.1} parent=1 // pred_check_branch
      %18 = sbr.rel (0) target = $region9
    $region8: #{tpu_custom_call.1} parent=1 // pred_region
      _
    $region9: #{tpu_custom_call.1} parent=1 // pred_fallthru
      _
    // Predicated region
    $region10: #{tpu_custom_call.1} parent=1 // pred_check
      _
    $region11: #{tpu_custom_call.1} parent=1 // pred_check_branch
      %20 = sbr.rel (0) target = $region13
    $region12: #{tpu_custom_call.1} parent=1 // pred_region
      _
    $region13: #{tpu_custom_call.1} parent=1 // pred_fallthru
      _
    // Predicated region
    $region14: #{tpu_custom_call.1} parent=1 // pred_check
      _
    $region15: #{tpu_custom_call.1} parent=1 // pred_check_branch
      %22 = sbr.rel (0) target = $region17
    $region16: #{tpu_custom_call.1} parent=1 // pred_region
      _
    $region17: #{tpu_custom_call.1} parent=1 // pred_fallthru
      _
    // Predicated region
    $region18: #{tpu_custom_call.1} parent=1 // pred_check
      _
    $region19: #{tpu_custom_call.1} parent=1 // pred_check_branch
      %24 = sbr.rel (0) target = $region21
    $region20: #{tpu_custom_call.1} parent=1 // pred_region
      _
    $region21: #{tpu_custom_call.1} parent=1 // pred_fallthru
      _
    // Predicated region
    $region22: #{tpu_custom_call.1} parent=1 // pred_check
      _
    $region23: #{tpu_custom_call.1} parent=1 // pred_check_branch
      %26 = sbr.rel (0) target = $region25
    $region24: #{tpu_custom_call.1} parent=1 // pred_region
      _
    $region25: #{tpu_custom_call.1} parent=1 // pred_fallthru
      _
    // Predicated region
    $region26: #{tpu_custom_call.1} parent=1 // pred_check
      _
    $region27: #{tpu_custom_call.1} parent=1 // pred_check_branch
      %28 = sbr.rel (0) target = $region29
    $region28: #{tpu_custom_call.1} parent=1 // pred_region
      _
    $region29: #{tpu_custom_call.1} parent=1 // pred_fallthru
      _
    // Predicated region
    $region30: #{tpu_custom_call.1} parent=1 // pred_check
      _
    $region31: #{tpu_custom_call.1} parent=1 // pred_check_branch
      %30 = sbr.rel (0) target = $region33
    $region32: #{tpu_custom_call.1} parent=1 // pred_region
      _
    $region33: #{tpu_custom_call.1} parent=1 // pred_fallthru
      _
    // Predicated region
    $region34: #{tpu_custom_call.1} parent=1 // pred_check
      _
    $region35: #{tpu_custom_call.1} parent=1 // pred_check_branch
      %32 = sbr.rel (0) target = $region37
    $region36: #{tpu_custom_call.1} parent=1 // pred_region
      _
    $region37: #{tpu_custom_call.1} parent=1 // pred_fallthru
      _
    %v33 = vld [vmem:[%s0] sm:$0xff]
    %v34 = vld [vmem:[%s0 + $0x8] sm:$0xff]
    %v35 = vld [vmem:[%s1] sm:$0xff]
    %v36 = vld [vmem:[%s1 + $0x8] sm:$0xff]
    %v37 = vld [vmem:[%s2] sm:$0x1]
    %v39 = vlaneseq
    %v40 = vshrl.u32 %v39, 7
    %v41 = vsub.s32 0, %v40
    %v42 = vrot.slane %v37, %v41
    %vm44 = vcmask 130048
    %v46 = vsel %vm44, %v33, 0
    %v49 = vsel %vm44, %v34, 0
    %51 = vmatprep.subr.mxu0 0.0
    %52 = vmatpush1.msra.mxu0 %v35
    %53 = vmatprep.subr.mxu0 0.0
    %54 = vmatpush1.msra.mxu0 %v36
    %55 = vmatprep.subr.mxu0 0.0
    %56 = vmatpush1.msra.mxu0 0.0
    %57 = vmatprep.subr.mxu0 0.0
    %58 = vmatpush1.msra.mxu0 0.0
    %59 = vmatprep.subr.mxu0 0.0
    %60 = vmatpush1.msra.mxu0 0.0
    %61 = vmatprep.subr.mxu0 0.0
    %62 = vmatpush1.msra.mxu0 0.0
    %63 = vmatprep.subr.mxu0 0.0
    %64 = vmatpush1.msra.mxu0 0.0
    %65 = vmatprep.subr.mxu0 0.0
    %66 = vmatpush1.msra.mxu0 0.0
    %67 = vmatprep.subr.mxu0 0.0
    %68 = vmatpush1.msra.mxu0 0.0
    %69 = vmatprep.subr.mxu0 0.0
    %70 = vmatpush1.msra.mxu0 0.0
    %71 = vmatprep.subr.mxu0 0.0
    %72 = vmatpush1.msra.mxu0 0.0
    %73 = vmatprep.subr.mxu0 0.0
    %74 = vmatpush1.msra.mxu0 0.0
    %75 = vmatprep.subr.mxu0 0.0
    %76 = vmatpush1.msra.mxu0 0.0
    %77 = vmatprep.subr.mxu0 0.0
    %78 = vmatpush1.msra.mxu0 0.0
    %79 = vmatprep.subr.mxu0 0.0
    %80 = vmatpush1.msra.mxu0 0.0
    %81 = vmatprep.subr.mxu0 0.0
    %82 = vmatpush1.msra.mxu0 0.0
    %83 = vmatprep.subr.mxu0 0.0
    %84 = vmatpush1.msra.mxu0 0.0
    %85 = vmatprep.subr.mxu0 0.0
    %86 = vmatpush1.msra.mxu0 0.0
    %87 = vmatprep.subr.mxu0 0.0
    %88 = vmatpush1.msra.mxu0 0.0
    %89 = vmatprep.subr.mxu0 0.0
    %90 = vmatpush1.msra.mxu0 0.0
    %91 = vmatprep.subr.mxu0 0.0
    %92 = vmatpush1.msra.mxu0 0.0
    %93 = vmatprep.subr.mxu0 0.0
    %94 = vmatpush1.msra.mxu0 0.0
    %95 = vmatprep.subr.mxu0 0.0
    %96 = vmatpush1.msra.mxu0 0.0
    %97 = vmatprep.subr.mxu0 0.0
    %98 = vmatpush1.msra.mxu0 0.0
    %99 = vmatprep.subr.mxu0 0.0
    %100 = vmatpush1.msra.mxu0 0.0
    %101 = vmatprep.subr.mxu0 0.0
    %102 = vmatpush1.msra.mxu0 0.0
    %103 = vmatprep.subr.mxu0 0.0
    %104 = vmatpush1.msra.mxu0 0.0
    %105 = vmatprep.subr.mxu0 0.0
    %106 = vmatpush1.msra.mxu0 0.0
    %107 = vmatprep.subr.mxu0 0.0
    %108 = vmatpush1.msra.mxu0 0.0
    %109 = vmatprep.subr.mxu0 0.0
    %110 = vmatpush1.msra.mxu0 0.0
    %111 = vmatprep.subr.mxu0 0.0
    %112 = vmatpush1.msra.mxu0 0.0
    %113 = vmatprep.subr.mxu0 0.0
    %114 = vmatpush1.msra.mxu0 0.0
    %115 = vmatprep.mubr.f32.mxu0 0.0
    %116 = vmatmul.mubr.f32.gmra.mrb[0].mxu0 %v46
    %v117 = vpop.f32.mrb[0].mxu0
    %v118 = vadd.f32 %v42, %v117
    %v119 = vpop.f32.mrb[0].mxu0
    %120 = vmatprep.mubr.f32.mxu0 0.0
    %121 = vmatmul.mubr.f32.gmra.mrb[0].mxu0 %v49
    %v122 = vpop.f32.mrb[0].mxu0
    %v123 = vadd.f32 %v42, %v122
    %v124 = vpop.f32.mrb[0].mxu0
    %125 = vdwg.mxu0
    %vm126 = vcmp.ge.f32.partialorder %v118, 0.0
    %vm127 = vcmp.ge.f32.partialorder %v123, 0.0
    %v128 = vmul.f32 %v118, 0.01
    %v129 = vmul.f32 %v123, 0.01
    %v130 = vsel %vm126, %v118, %v128
    %v131 = vsel %vm127, %v123, %v129
    %v132 = vld [vmem:[%s3] sm:$0xff]
    %v133 = vld [vmem:[%s3 + $0x8] sm:$0xff]
    %v134 = vld [vmem:[%s3 + $0x10] sm:$0xff]
    %v135 = vld [vmem:[%s3 + $0x18] sm:$0xff]
    %v136 = vld [vmem:[%s4] sm:$0x1]
    %v138 = vlaneseq
    %v139 = vshrl.u32 %v138, 7
    %v140 = vsub.s32 0, %v139
    %v141 = vrot.slane %v136, %v140
    %vm143 = vcmask 261120
    %v145 = vsel %vm143, %v130, 0
    %v148 = vsel %vm143, %v131, 0
    %150 = vmatprep.subr.mxu0 0.0
    %151 = vmatpush1.msra.mxu0 %v132
    %152 = vmatprep.subr.mxu0 0.0
    %153 = vmatpush1.msra.mxu0 %v133
    %154 = vmatprep.subr.mxu0 0.0
    %155 = vmatpush1.msra.mxu0 %v134
    %156 = vmatprep.subr.mxu0 0.0
    %157 = vmatpush1.msra.mxu0 %v135
    %158 = vmatprep.subr.mxu0 0.0
    %159 = vmatpush1.msra.mxu0 0.0
    %160 = vmatprep.subr.mxu0 0.0
    %161 = vmatpush1.msra.mxu0 0.0
    %162 = vmatprep.subr.mxu0 0.0
    %163 = vmatpush1.msra.mxu0 0.0
    %164 = vmatprep.subr.mxu0 0.0
    %165 = vmatpush1.msra.mxu0 0.0
    %166 = vmatprep.subr.mxu0 0.0
    %167 = vmatpush1.msra.mxu0 0.0
    %168 = vmatprep.subr.mxu0 0.0
    %169 = vmatpush1.msra.mxu0 0.0
    %170 = vmatprep.subr.mxu0 0.0
    %171 = vmatpush1.msra.mxu0 0.0
    %172 = vmatprep.subr.mxu0 0.0
    %173 = vmatpush1.msra.mxu0 0.0
    %174 = vmatprep.subr.mxu0 0.0
    %175 = vmatpush1.msra.mxu0 0.0
    %176 = vmatprep.subr.mxu0 0.0
    %177 = vmatpush1.msra.mxu0 0.0
    %178 = vmatprep.subr.mxu0 0.0
    %179 = vmatpush1.msra.mxu0 0.0
    %180 = vmatprep.subr.mxu0 0.0
    %181 = vmatpush1.msra.mxu0 0.0
    %182 = vmatprep.subr.mxu0 0.0
    %183 = vmatpush1.msra.mxu0 0.0
    %184 = vmatprep.subr.mxu0 0.0
    %185 = vmatpush1.msra.mxu0 0.0
    %186 = vmatprep.subr.mxu0 0.0
    %187 = vmatpush1.msra.mxu0 0.0
    %188 = vmatprep.subr.mxu0 0.0
    %189 = vmatpush1.msra.mxu0 0.0
    %190 = vmatprep.subr.mxu0 0.0
    %191 = vmatpush1.msra.mxu0 0.0
    %192 = vmatprep.subr.mxu0 0.0
    %193 = vmatpush1.msra.mxu0 0.0
    %194 = vmatprep.subr.mxu0 0.0
    %195 = vmatpush1.msra.mxu0 0.0
    %196 = vmatprep.subr.mxu0 0.0
    %197 = vmatpush1.msra.mxu0 0.0
    %198 = vmatprep.subr.mxu0 0.0
    %199 = vmatpush1.msra.mxu0 0.0
    %200 = vmatprep.subr.mxu0 0.0
    %201 = vmatpush1.msra.mxu0 0.0
    %202 = vmatprep.subr.mxu0 0.0
    %203 = vmatpush1.msra.mxu0 0.0
    %204 = vmatprep.subr.mxu0 0.0
    %205 = vmatpush1.msra.mxu0 0.0
    %206 = vmatprep.subr.mxu0 0.0
    %207 = vmatpush1.msra.mxu0 0.0
    %208 = vmatprep.subr.mxu0 0.0
    %209 = vmatpush1.msra.mxu0 0.0
    %210 = vmatprep.subr.mxu0 0.0
    %211 = vmatpush1.msra.mxu0 0.0
    %212 = vmatprep.subr.mxu0 0.0
    %213 = vmatpush1.msra.mxu0 0.0
    %214 = vmatprep.mubr.f32.mxu0 0.0
    %215 = vmatmul.mubr.f32.gmra.mrb[0].mxu0 %v145
    %v216 = vpop.f32.mrb[0].mxu0
    %v217 = vadd.f32 %v141, %v216
    %v218 = vpop.f32.mrb[0].mxu0
    %219 = vmatprep.mubr.f32.mxu0 0.0
    %220 = vmatmul.mubr.f32.gmra.mrb[0].mxu0 %v148
    %v221 = vpop.f32.mrb[0].mxu0
    %v222 = vadd.f32 %v141, %v221
    %v223 = vpop.f32.mrb[0].mxu0
    %224 = vdwg.mxu0
    %vm225 = vcmp.ge.f32.partialorder %v217, 0.0
    %vm226 = vcmp.ge.f32.partialorder %v222, 0.0
    %v227 = vmul.f32 %v217, 0.02
    %v228 = vmul.f32 %v222, 0.02
    %v229 = vsel %vm225, %v217, %v227
    %v230 = vsel %vm226, %v222, %v228
    %v231 = vld [vmem:[%s5] sm:$0xff]
    %v232 = vld [vmem:[%s5 + $0x8] sm:$0xff]
    %v233 = vld [vmem:[%s6] sm:$0x1]
    %v235 = vlaneseq
    %v236 = vshrl.u32 %v235, 7
    %v237 = vsub.s32 0, %v236
    %v238 = vrot.slane %v233, %v237
    %v241 = vsel %vm44, %v229, 0
    %v244 = vsel %vm44, %v230, 0
    %246 = vmatprep.subr.mxu0 0.0
    %247 = vmatpush1.msra.mxu0 %v231
    %248 = vmatprep.subr.mxu0 0.0
    %249 = vmatpush1.msra.mxu0 %v232
    %250 = vmatprep.subr.mxu0 0.0
    %251 = vmatpush1.msra.mxu0 0.0
    %252 = vmatprep.subr.mxu0 0.0
    %253 = vmatpush1.msra.mxu0 0.0
    %254 = vmatprep.subr.mxu0 0.0
    %255 = vmatpush1.msra.mxu0 0.0
    %256 = vmatprep.subr.mxu0 0.0
    %257 = vmatpush1.msra.mxu0 0.0
    %258 = vmatprep.subr.mxu0 0.0
    %259 = vmatpush1.msra.mxu0 0.0
    %260 = vmatprep.subr.mxu0 0.0
    %261 = vmatpush1.msra.mxu0 0.0
    %262 = vmatprep.subr.mxu0 0.0
    %263 = vmatpush1.msra.mxu0 0.0
    %264 = vmatprep.subr.mxu0 0.0
    %265 = vmatpush1.msra.mxu0 0.0
    %266 = vmatprep.subr.mxu0 0.0
    %267 = vmatpush1.msra.mxu0 0.0
    %268 = vmatprep.subr.mxu0 0.0
    %269 = vmatpush1.msra.mxu0 0.0
    %270 = vmatprep.subr.mxu0 0.0
    %271 = vmatpush1.msra.mxu0 0.0
    %272 = vmatprep.subr.mxu0 0.0
    %273 = vmatpush1.msra.mxu0 0.0
    %274 = vmatprep.subr.mxu0 0.0
    %275 = vmatpush1.msra.mxu0 0.0
    %276 = vmatprep.subr.mxu0 0.0
    %277 = vmatpush1.msra.mxu0 0.0
    %278 = vmatprep.subr.mxu0 0.0
    %279 = vmatpush1.msra.mxu0 0.0
    %280 = vmatprep.subr.mxu0 0.0
    %281 = vmatpush1.msra.mxu0 0.0
    %282 = vmatprep.subr.mxu0 0.0
    %283 = vmatpush1.msra.mxu0 0.0
    %284 = vmatprep.subr.mxu0 0.0
    %285 = vmatpush1.msra.mxu0 0.0
    %286 = vmatprep.subr.mxu0 0.0
    %287 = vmatpush1.msra.mxu0 0.0
    %288 = vmatprep.subr.mxu0 0.0
    %289 = vmatpush1.msra.mxu0 0.0
    %290 = vmatprep.subr.mxu0 0.0
    %291 = vmatpush1.msra.mxu0 0.0
    %292 = vmatprep.subr.mxu0 0.0
    %293 = vmatpush1.msra.mxu0 0.0
    %294 = vmatprep.subr.mxu0 0.0
    %295 = vmatpush1.msra.mxu0 0.0
    %296 = vmatprep.subr.mxu0 0.0
    %297 = vmatpush1.msra.mxu0 0.0
    %298 = vmatprep.subr.mxu0 0.0
    %299 = vmatpush1.msra.mxu0 0.0
    %300 = vmatprep.subr.mxu0 0.0
    %301 = vmatpush1.msra.mxu0 0.0
    %302 = vmatprep.subr.mxu0 0.0
    %303 = vmatpush1.msra.mxu0 0.0
    %304 = vmatprep.subr.mxu0 0.0
    %305 = vmatpush1.msra.mxu0 0.0
    %306 = vmatprep.subr.mxu0 0.0
    %307 = vmatpush1.msra.mxu0 0.0
    %308 = vmatprep.subr.mxu0 0.0
    %309 = vmatpush1.msra.mxu0 0.0
    %310 = vmatprep.mubr.f32.mxu0 0.0
    %311 = vmatmul.mubr.f32.gmra.mrb[0].mxu0 %v241
    %v312 = vpop.f32.mrb[0].mxu0
    %v313 = vadd.f32 %v238, %v312
    %v314 = vpop.f32.mrb[0].mxu0
    %315 = vmatprep.mubr.f32.mxu0 0.0
    %316 = vmatmul.mubr.f32.gmra.mrb[0].mxu0 %v244
    %v317 = vpop.f32.mrb[0].mxu0
    %v318 = vadd.f32 %v238, %v317
    %v319 = vpop.f32.mrb[0].mxu0
    %320 = vdwg.mxu0
    %vm321 = vcmp.ge.f32.partialorder %v313, 0.0
    %vm322 = vcmp.ge.f32.partialorder %v318, 0.0
    %v323 = vmul.f32 %v313, 0.02
    %v324 = vmul.f32 %v318, 0.02
    %v325 = vsel %vm321, %v313, %v323
    %v326 = vsel %vm322, %v318, %v324
    %v327 = vld [vmem:[%s7] sm:$0xff]
    %v328 = vld [vmem:[%s7 + $0x8] sm:$0xff]
    %v329 = vld [vmem:[%s7 + $0x10] sm:$0xff]
    %v330 = vld [vmem:[%s7 + $0x18] sm:$0xff]
    %v331 = vld [vmem:[%s8] sm:$0x1]
    %v333 = vlaneseq
    %v334 = vshrl.u32 %v333, 7
    %v335 = vsub.s32 0, %v334
    %v336 = vrot.slane %v331, %v335
    %v339 = vsel %vm143, %v325, 0
    %v342 = vsel %vm143, %v326, 0
    %344 = vmatprep.subr.mxu0 0.0
    %345 = vmatpush1.msra.mxu0 %v327
    %346 = vmatprep.subr.mxu0 0.0
    %347 = vmatpush1.msra.mxu0 %v328
    %348 = vmatprep.subr.mxu0 0.0
    %349 = vmatpush1.msra.mxu0 %v329
    %350 = vmatprep.subr.mxu0 0.0
    %351 = vmatpush1.msra.mxu0 %v330
    %352 = vmatprep.subr.mxu0 0.0
    %353 = vmatpush1.msra.mxu0 0.0
    %354 = vmatprep.subr.mxu0 0.0
    %355 = vmatpush1.msra.mxu0 0.0
    %356 = vmatprep.subr.mxu0 0.0
    %357 = vmatpush1.msra.mxu0 0.0
    %358 = vmatprep.subr.mxu0 0.0
    %359 = vmatpush1.msra.mxu0 0.0
    %360 = vmatprep.subr.mxu0 0.0
    %361 = vmatpush1.msra.mxu0 0.0
    %362 = vmatprep.subr.mxu0 0.0
    %363 = vmatpush1.msra.mxu0 0.0
    %364 = vmatprep.subr.mxu0 0.0
    %365 = vmatpush1.msra.mxu0 0.0
    %366 = vmatprep.subr.mxu0 0.0
    %367 = vmatpush1.msra.mxu0 0.0
    %368 = vmatprep.subr.mxu0 0.0
    %369 = vmatpush1.msra.mxu0 0.0
    %370 = vmatprep.subr.mxu0 0.0
    %371 = vmatpush1.msra.mxu0 0.0
    %372 = vmatprep.subr.mxu0 0.0
    %373 = vmatpush1.msra.mxu0 0.0
    %374 = vmatprep.subr.mxu0 0.0
    %375 = vmatpush1.msra.mxu0 0.0
    %376 = vmatprep.subr.mxu0 0.0
    %377 = vmatpush1.msra.mxu0 0.0
    %378 = vmatprep.subr.mxu0 0.0
    %379 = vmatpush1.msra.mxu0 0.0
    %380 = vmatprep.subr.mxu0 0.0
    %381 = vmatpush1.msra.mxu0 0.0
    %382 = vmatprep.subr.mxu0 0.0
    %383 = vmatpush1.msra.mxu0 0.0
    %384 = vmatprep.subr.mxu0 0.0
    %385 = vmatpush1.msra.mxu0 0.0
    %386 = vmatprep.subr.mxu0 0.0
    %387 = vmatpush1.msra.mxu0 0.0
    %388 = vmatprep.subr.mxu0 0.0
    %389 = vmatpush1.msra.mxu0 0.0
    %390 = vmatprep.subr.mxu0 0.0
    %391 = vmatpush1.msra.mxu0 0.0
    %392 = vmatprep.subr.mxu0 0.0
    %393 = vmatpush1.msra.mxu0 0.0
    %394 = vmatprep.subr.mxu0 0.0
    %395 = vmatpush1.msra.mxu0 0.0
    %396 = vmatprep.subr.mxu0 0.0
    %397 = vmatpush1.msra.mxu0 0.0
    %398 = vmatprep.subr.mxu0 0.0
    %399 = vmatpush1.msra.mxu0 0.0
    %400 = vmatprep.subr.mxu0 0.0
    %401 = vmatpush1.msra.mxu0 0.0
    %402 = vmatprep.subr.mxu0 0.0
    %403 = vmatpush1.msra.mxu0 0.0
    %404 = vmatprep.subr.mxu0 0.0
    %405 = vmatpush1.msra.mxu0 0.0
    %406 = vmatprep.subr.mxu0 0.0
    %407 = vmatpush1.msra.mxu0 0.0
    %408 = vmatprep.mubr.f32.mxu0 0.0
    %409 = vmatmul.mubr.f32.gmra.mrb[0].mxu0 %v339
    %v410 = vpop.f32.mrb[0].mxu0
    %v411 = vadd.f32 %v336, %v410
    %v412 = vpop.f32.mrb[0].mxu0
    %413 = vmatprep.mubr.f32.mxu0 0.0
    %414 = vmatmul.mubr.f32.gmra.mrb[0].mxu0 %v342
    %v415 = vpop.f32.mrb[0].mxu0
    %v416 = vadd.f32 %v336, %v415
    %v417 = vpop.f32.mrb[0].mxu0
    %418 = vdwg.mxu0
    %v419 = vxor.u32 %v411, 2147483648
    %v420 = vxor.u32 %v416, 2147483648
    %v421 = vmul.f32 %v419, 1.442695
    %v422 = vpow.pop %v421
    %v423 = vmul.f32 %v420, 1.442695
    %v424 = vpow.pop %v423
    %v425 = vadd.f32 %v422, 1.0
    %v426 = vadd.f32 %v424, 1.0
    %v427 = vrcp.pop %v425
    %v428 = vmul.f32 1.0, %v427
    %v429 = vrcp.pop %v426
    %v430 = vmul.f32 1.0, %v429
    %vm431 = vcmask 89088
    %432 = vst.msk [vmem:[#allocation2] sm:$0xff] %vm431, %v428
    %433 = vst.msk [vmem:[#allocation2 + $0x8] sm:$0xff] %vm431, %v430
    // Predicated region
    $region38: #{tpu_custom_call.1} parent=1 // pred_check
      _
    $region39: #{tpu_custom_call.1} parent=1 // pred_check_branch
      %435 = sbr.rel (0) target = $region41
    $region40: #{tpu_custom_call.1} parent=1 // pred_region
      %s437 = ssub.s32 256, 128
      %438 = vsyncadd [#allocation3], %s437
      %s439 = sshll.u32 [#allocation2], 4
      %s440 = int_to_ptr.vmem [resolvable:$true] %s439
      %445 = dma.vmem_to_hbm [thread:$0]  %s440, 128, %s9, [#allocation3], 128, 128, 8
    $region41: #{tpu_custom_call.1} parent=1 // pred_fallthru
      _
    // Predicated region
    $region42: #{tpu_custom_call.1} parent=1 // pred_check
      _
    $region43: #{tpu_custom_call.1} parent=1 // pred_check_branch
      %447 = sbr.rel (0) target = $region45
    $region44: #{tpu_custom_call.1} parent=1 // pred_region
      %448 = dma.done [#allocation3], 256
    $region45: #{tpu_custom_call.1} parent=1 // pred_fallthru
      _
    %449 = vsyncpa [#allocation3], 1

</llo_original>
